<compile_context>
chip_gen: v6e
topology: v6e:2x2x1
jax: 0.10.0
libtpu: 0.0.40
codegen_flags: <defaults>
</compile_context>

<pallas_src>
import functools

import jax
import jax.numpy as jnp
from jax.experimental import pallas as pl
from jax.experimental.pallas import tpu as pltpu


def _conv1x1_relu_kernel(x_ref, w_ref, b_ref, o_ref):
    # x_ref: (cin, tn)    pixel-lane-major input tile (batch dim squeezed)
    # w_ref: (cout, cin)  resident weight (constant index_map)
    # b_ref: (cout, 1)    resident f32 bias
    # o_ref: (cout, tn)   pixel-lane-major output tile (already NCHW-flat)
    acc = jnp.dot(w_ref[...], x_ref[...], preferred_element_type=jnp.float32)
    acc = acc + b_ref[...]                       # broadcast over lanes
    o_ref[...] = jnp.maximum(acc, 0.0).astype(o_ref.dtype)


def pixel_shuffle(x, r):
    # x: (B, C, H, W) -> (B, C // r^2, H*r, W*r); matches torch.nn.PixelShuffle(r).
    B, C, H, W = x.shape
    cin = C // (r * r)
    x = x.reshape(B, cin, r, r, H, W)
    x = jnp.transpose(x, (0, 1, 4, 2, 5, 3))     # (B, cin, H, r, W, r)
    return x.reshape(B, cin, H * r, W * r)


def _pick_pixel_tile(n_pix, batch, cap, min_tile=512, target_steps=8):
    """Pixel tile for the lane axis.

    - multiple of 128 (lane-dense, unmasked stores) or == n_pix for tiny images;
    - capped (keeps VMEM small and bounded, no divisibility of n_pix required
      because the grid uses cdiv + a masked tail block);
    - shrunk until there are enough grid steps to occupy both v7x TensorCores
      and keep the DMA pipeline full, as long as tiles stay >= min_tile.
    """
    if n_pix <= 128:
        return n_pix                              # single block == full dim (legal)
    cap128 = max(128, (cap // 128) * 128)
    tn = max(128, min(cap128, (n_pix // 128) * 128))
    while tn > min_tile and batch * ((n_pix + tn - 1) // tn) < target_steps:
        tn = max(min_tile, ((tn // 2) // 128) * 128)
    return tn


@functools.partial(jax.jit, static_argnames=("up_factor", "tile_cap"))
def up_forward(x, w, b, up_factor=2, tile_cap=16384):
    """Forward pass of `_up`: PixelShuffle(up_factor) -> 1x1 conv -> ReLU.

    x: (B, C, H, W) with C % up_factor**2 == 0
    w: (cout, cin), cin = C // up_factor**2  (== PyTorch conv weight[:, :, 0, 0])
    b: (cout,)
    returns: (B, cout, H*up_factor, W*up_factor) in NCHW, matching PyTorch.
    """
    B, C, H, W = x.shape
    r = up_factor
    cin = C // (r * r)
    cout = w.shape[0]

    # PixelShuffle on the (small, cin-channel) pre-conv tensor; the reshape to
    # NCHW-flat below is a free view.  See TODO(synk) above about full fusion.
    xs = pixel_shuffle(x, r)                      # (B, cin, Hu, Wu)
    Hu, Wu = H * r, W * r
    n_pix = Hu * Wu
    xf = xs.reshape(B, cin, n_pix)                # contiguous -> free view

    tn = _pick_pixel_tile(n_pix, B, cap=tile_cap)
    n_tiles = pl.cdiv(n_pix, tn)                  # masked tail block if needed
    grid = (B, n_tiles)

    w_k = w.astype(x.dtype)                       # bf16 weights if x is bf16
    b_k = b.reshape(cout, 1).astype(jnp.float32)  # added post-MXU in f32

    itemsize = jnp.dtype(x.dtype).itemsize
    # Double-buffered x/out blocks + resident weight/bias, with generous margin.
    step_bytes = 2 * (cin + cout) * tn * itemsize + cout * (cin * itemsize + 4)
    vmem_limit = int(min(48 * 1024 * 1024, max(16 * 1024 * 1024, 2 * step_bytes)))

    cost = pl.CostEstimate(
        flops=2 * B * n_pix * cin * cout,
        transcendentals=0,
        bytes_accessed=B * n_pix * (cin + cout) * itemsize
                       + cout * cin * itemsize + cout * 4,
    )

    out_flat = pl.pallas_call(
        _conv1x1_relu_kernel,
        out_shape=jax.ShapeDtypeStruct((B, cout, n_pix), x.dtype),
        grid_spec=pltpu.PrefetchScalarGridSpec(
            num_scalar_prefetch=0,
            grid=grid,
            in_specs=[
                pl.BlockSpec((pl.Squeezed(), cin, tn), lambda bi, pi: (bi, 0, pi)),
                pl.BlockSpec((cout, cin), lambda bi, pi: (0, 0)),
                pl.BlockSpec((cout, 1), lambda bi, pi: (0, 0)),
            ],
            out_specs=pl.BlockSpec((pl.Squeezed(), cout, tn),
                                   lambda bi, pi: (bi, 0, pi)),
        ),
        compiler_params=pltpu.CompilerParams(
            dimension_semantics=("parallel", "parallel"),
            vmem_limit_bytes=vmem_limit,
        ),
        cost_estimate=cost,
    )(xf, w_k, b_k)

    return out_flat.reshape(B, cout, Hu, Wu)      # free view, already NCHW


def up_reference(x, w, b, up_factor=2):
    """Pure-JAX reference matching PyTorch semantics (accurate f32 math)."""
    xs = pixel_shuffle(x.astype(jnp.float32), up_factor)
    y = jnp.einsum("bchw,oc->bohw", xs, w.astype(jnp.float32),
                   precision=jax.lax.Precision.HIGHEST)
    y = y + b.astype(jnp.float32)[None, :, None, None]
    return jnp.maximum(y, 0.0)


if __name__ == "__main__":
    key = jax.random.PRNGKey(0)
    r = 2

    # (B, C, H, W, cout, dtype, atol): small config, module-default channel
    # config (64 -> 64), a non-128-multiple spatial size (exercises the masked
    # tail block + non-multiple-of-8 cout), and a bf16 run (v5e-friendly).
    configs = [
        (2, 16, 16, 16, 16, jnp.float32, 1e-4),
        (2, 64, 8, 8, 64, jnp.float32, 1e-4),
        (1, 16, 10, 12, 24, jnp.float32, 1e-4),
        (2, 64, 8, 8, 64, jnp.bfloat16, 1e-1),
    ]

    for (B, C, H, W, cout, dtype, tol) in configs:
        k_x, k_w, k_b, key = jax.random.split(key, 4)
        cin = C // (r * r)

        x = jax.random.normal(k_x, (B, C, H, W), dtype=jnp.float32)
        # PyTorch conv weight is (cout, cin, 1, 1) -> stored here as (cout, cin).
        w = jax.random.normal(k_w, (cout, cin), dtype=jnp.float32) / jnp.sqrt(cin)
        b = jax.random.normal(k_b, (cout,), dtype=jnp.float32) * 0.1

        x = x.astype(dtype)
        w = w.astype(dtype)
        b = b.astype(dtype)

        out = jax.block_until_ready(up_forward(x, w, b, up_factor=r))
        ref = up_reference(x, w, b, up_factor=r)

        assert out.shape == (B, cout, H * r, W * r), out.shape
        assert out.dtype == dtype, out.dtype
        err = float(jnp.max(jnp.abs(out.astype(jnp.float32) - ref)))
        assert err <= tol, (B, C, H, W, cout, str(dtype), err)

    print("KERNEL_OK")
</pallas_src>

<mosaic_0001>
module attributes {stable_mosaic.version = 11 : i64} {
  func.func @_conv1x1_relu_kernel(%arg0: i32, %arg1: i32, %arg2: memref<1x4x512xf32, #tpu.memory_space<vmem>>, %arg3: memref<16x4xf32, #tpu.memory_space<vmem>>, %arg4: memref<16x1xf32, #tpu.memory_space<vmem>>, %arg5: memref<1x16x512xf32, #tpu.memory_space<vmem>>) attributes {dimension_semantics = [#tpu.dimension_semantics<parallel>, #tpu.dimension_semantics<parallel>], iteration_bounds = array<i64: 2, 2>, scalar_prefetch = 0 : i64, scratch_operands = 0 : i64, tpu.core_type = #tpu.core_type<tc>, window_params = [{transform_indices = @transform_0, window_bounds = array<i64: 1, 4, 512>}, {pipeline_mode = #tpu.pipeline_mode<synchronous>, transform_indices = @transform_1, window_bounds = array<i64: 16, 4>}, {pipeline_mode = #tpu.pipeline_mode<synchronous>, transform_indices = @transform_2, window_bounds = array<i64: 16, 1>}, {transform_indices = @transform_3, window_bounds = array<i64: 1, 16, 512>}]} {
    %c0 = arith.constant 0 : index
    %c0_0 = arith.constant 0 : index
    %0 = vector.load %arg3[%c0, %c0_0] : memref<16x4xf32, #tpu.memory_space<vmem>>, vector<16x4xf32>
    %c0_1 = arith.constant 0 : index
    %c0_2 = arith.constant 0 : index
    %c0_3 = arith.constant 0 : index
    %1 = vector.load %arg2[%c0_1, %c0_2, %c0_3] : memref<1x4x512xf32, #tpu.memory_space<vmem>>, vector<1x4x512xf32>
    %2 = vector.shape_cast %1 : vector<1x4x512xf32> to vector<4x512xf32>
    %cst = arith.constant dense<0.000000e+00> : vector<16x512xf32>
    %3 = tpu.matmul %0, %2, %cst {dimension_numbers = #tpu.dot_dimension_numbers<[1], [0], [0], [1], [0, 0, 1, 1], [], []>} : vector<16x4xf32>, vector<4x512xf32>, vector<16x512xf32> -> vector<16x512xf32>
    %c0_4 = arith.constant 0 : index
    %c0_5 = arith.constant 0 : index
    %4 = vector.load %arg4[%c0_4, %c0_5] : memref<16x1xf32, #tpu.memory_space<vmem>>, vector<16x1xf32>
    %5 = vector.broadcast %4 : vector<16x1xf32> to vector<16x512xf32>
    %6 = arith.addf %3, %5 : vector<16x512xf32>
    %cst_6 = arith.constant 0.000000e+00 : f32
    %7 = vector.broadcast %cst_6 : f32 to vector<16x512xf32>
    %8 = arith.maximumf %6, %7 : vector<16x512xf32>
    %c0_7 = arith.constant 0 : index
    %c0_8 = arith.constant 0 : index
    %c0_9 = arith.constant 0 : index
    %9 = vector.load %arg5[%c0_7, %c0_8, %c0_9] : memref<1x16x512xf32, #tpu.memory_space<vmem>>, vector<1x16x512xf32>
    %10 = vector.shape_cast %9 : vector<1x16x512xf32> to vector<16x512xf32>
    %11 = vector.shape_cast %8 : vector<16x512xf32> to vector<1x16x512xf32>
    tpu.vector_store %arg5[%c0_7, %c0_8, %c0_9], %11 {strides = array<i32>} : memref<1x16x512xf32, #tpu.memory_space<vmem>>, vector<1x16x512xf32>,
    return
  }
  func.func @transform_0(%arg0: i32, %arg1: i32) -> (i32, i32, i32) {
    %c0_i32 = arith.constant 0 : i32
    %c0_i32_0 = arith.constant 0 : i32
    return %arg0, %c0_i32, %arg1 : i32, i32, i32
  }
  func.func @transform_1(%arg0: i32, %arg1: i32) -> (i32, i32) {
    %c0_i32 = arith.constant 0 : i32
    %c0_i32_0 = arith.constant 0 : i32
    %c0_i32_1 = arith.constant 0 : i32
    return %c0_i32, %c0_i32_0 : i32, i32
  }
  func.func @transform_2(%arg0: i32, %arg1: i32) -> (i32, i32) {
    %c0_i32 = arith.constant 0 : i32
    %c0_i32_0 = arith.constant 0 : i32
    %c0_i32_1 = arith.constant 0 : i32
    return %c0_i32, %c0_i32_0 : i32, i32
  }
  func.func @transform_3(%arg0: i32, %arg1: i32) -> (i32, i32, i32) {
    %c0_i32 = arith.constant 0 : i32
    %c0_i32_0 = arith.constant 0 : i32
    return %arg0, %c0_i32, %arg1 : i32, i32, i32
  }
}

</mosaic_0001>

<llo_original>
// kernel: up_forward.1
$region0: #{up_forward.1}
  #allocation0 [shape = 'u32[]', space=smem, size = 0x4, offset = 0x4, fixed_abs, tag = 'smem constant byte address 0x4 - core index']
  #allocation1 [shape = 'u32[144,128]{1,0:T(1,128)}', space=vmem, size = 0x12000, scoped, tag = 'internal scratch']
  %s0 = inlined_call_operand.vmem [shape: f32[2,4,1024], index: 0, kind: input, shape index: {}]
  %s1 = inlined_call_operand.vmem [shape: f32[16,4], index: 1, kind: input, shape index: {}]
  %s2 = inlined_call_operand.vmem [shape: f32[16,1], index: 2, kind: input, shape index: {}]
  %s3 = inlined_call_operand.vmem [shape: f32[2,16,1024], index: 3, kind: output, shape index: {}]
  %s4 = sld [smem:[#allocation0]]
  $region64: #{up_forward.1} parent=0
    _
  %s6 = ssub.s32 1, %s4
  %s7 = scalar_select 0, %s6, %s4
  $region1: #{up_forward.1} parent=0
    #allocation2 [shape = 'u8[65536]{0}', space=vmem, size = 0x10000, scoped, tag = 'output window, operand 0']
    loop: start=0, step=1, limit=6
    $region2: #{up_forward.1} parent=1 // loop_pre_header
      _
    $region3: #{up_forward.1} parent=1 // loop_header
      %s9 = sphi 0, %s13
      %p10 = scmp.ge.s32.totalorder %s9, 6
      %s16 = sphi 0, %s28
      %s17 = sphi 0, %s24
      %s18 = sphi 0, %s16
      %s19 = sphi 0, %s17
      %s20 = sphi 0, %s18
      %s21 = sphi 0, %s19
      %s33 = sphi 0, %s35
      %s36 = sphi 0, %s33
      %s37 = sphi 0, %s36
      %s53 = sphi 0, %s37
      %s57 = sphi 0, %s57
      %s59 = sphi 0, %s57
      %s60 = sphi 0, %s59
      %s74 = sphi 0, %s60
      %s78 = sphi 0, %s78
      %s80 = sphi 0, %s78
      %s81 = sphi 0, %s80
      %s95 = sphi 0, %s81
      %s103 = sphi 0, %s105
      %s106 = sphi 0, %s103
      %s107 = sphi 0, %s106
      %s123 = sphi 0, %s107
    $region4: #{up_forward.1} parent=1 // loop_header_branch
      %12 = sbr.rel (%p10) target = $region8
    $region5: #{up_forward.1} parent=1 // loop_body
      %s14 = ssub.s32 %s9, 1
      %s15 = ssub.s32 %s9, 2
      %s22 = sadd.s32 1, %s17
      %p23 = scmp.ge.s32.totalorder %s22, 2
      %s24 = scalar_select %p23, 0, %s22
      %s25 = sadd.s32 1, %s16
      %s26 = scalar_select %p23, %s25, %s16
      %p27 = scmp.ge.s32.totalorder %s26, 2
      %s28 = scalar_select %p27, 0, %s26
      %s29 = ssub.s32 %s16, %s28
      %s30 = ssub.s32 %s17, %s24
      %s31 = sor.u32 %s29, %s30
      %p32 = scmp.eq.s32.totalorder %s31, 0
      %s34 = sadd.s32 %s33, 1
      %s35 = scalar_select %p32, %s33, %s34
      %p38 = pneg %p32
      %p39 = scmp.eq.s32.totalorder %s9, 3
      %p40 = por %p38, %p39
      %p41 = scmp.ne.s32.totalorder %s33, %s36
      %p42 = scmp.eq.s32.totalorder %s9, 0
      %p43 = por %p41, %p42
      %p44 = scmp.ne.s32.totalorder %s33, %s36
      %p45 = scmp.eq.s32.totalorder %s14, 3
      %p46 = por %p44, %p45
      %p47 = scmp.ne.s32.totalorder %s36, %s37
      %p48 = scmp.eq.s32.totalorder %s14, 0
      %p49 = por %p47, %p48
      %p50 = scmp.ne.s32.totalorder %s36, %s37
      %p51 = scmp.eq.s32.totalorder %s15, 3
      %p52 = por %p50, %p51
      %p54 = scmp.ne.s32.totalorder %s37, %s53
      %p55 = scmp.eq.s32.totalorder %s15, 0
      %p56 = por %p54, %p55
      %s58 = sadd.s32 %s57, 1
      %p61 = scmp.eq.s32.totalorder %s9, 3
      %p62 = scmp.ne.s32.totalorder %s57, %s59
      %p63 = scmp.eq.s32.totalorder %s9, 0
      %p64 = por %p62, %p63
      %p65 = scmp.ne.s32.totalorder %s57, %s59
      %p66 = scmp.eq.s32.totalorder %s14, 3
      %p67 = por %p65, %p66
      %p68 = scmp.ne.s32.totalorder %s59, %s60
      %p69 = scmp.eq.s32.totalorder %s14, 0
      %p70 = por %p68, %p69
      %p71 = scmp.ne.s32.totalorder %s59, %s60
      %p72 = scmp.eq.s32.totalorder %s15, 3
      %p73 = por %p71, %p72
      %p75 = scmp.ne.s32.totalorder %s60, %s74
      %p76 = scmp.eq.s32.totalorder %s15, 0
      %p77 = por %p75, %p76
      %s79 = sadd.s32 %s78, 1
      %p82 = scmp.eq.s32.totalorder %s9, 3
      %p83 = scmp.ne.s32.totalorder %s78, %s80
      %p84 = scmp.eq.s32.totalorder %s9, 0
      %p85 = por %p83, %p84
      %p86 = scmp.ne.s32.totalorder %s78, %s80
      %p87 = scmp.eq.s32.totalorder %s14, 3
      %p88 = por %p86, %p87
      %p89 = scmp.ne.s32.totalorder %s80, %s81
      %p90 = scmp.eq.s32.totalorder %s14, 0
      %p91 = por %p89, %p90
      %p92 = scmp.ne.s32.totalorder %s80, %s81
      %p93 = scmp.eq.s32.totalorder %s15, 3
      %p94 = por %p92, %p93
      %p96 = scmp.ne.s32.totalorder %s81, %s95
      %p97 = scmp.eq.s32.totalorder %s15, 0
      %p98 = por %p96, %p97
      %s99 = ssub.s32 %s16, %s28
      %s100 = ssub.s32 %s17, %s24
      %s101 = sor.u32 %s99, %s100
      %p102 = scmp.eq.s32.totalorder %s101, 0
      %s104 = sadd.s32 %s103, 1
      %s105 = scalar_select %p102, %s103, %s104
      %p108 = pneg %p102
      %p109 = scmp.eq.s32.totalorder %s9, 3
      %p110 = por %p108, %p109
      %p111 = scmp.ne.s32.totalorder %s103, %s106
      %p112 = scmp.eq.s32.totalorder %s9, 0
      %p113 = por %p111, %p112
      %p114 = scmp.ne.s32.totalorder %s103, %s106
      %p115 = scmp.eq.s32.totalorder %s14, 3
      %p116 = por %p114, %p115
      %p117 = scmp.ne.s32.totalorder %s106, %s107
      %p118 = scmp.eq.s32.totalorder %s14, 0
      %p119 = por %p117, %p118
      %p120 = scmp.ne.s32.totalorder %s106, %s107
      %p121 = scmp.eq.s32.totalorder %s15, 3
      %p122 = por %p120, %p121
      %p124 = scmp.ne.s32.totalorder %s107, %s123
      %p125 = scmp.eq.s32.totalorder %s15, 0
      %p126 = por %p124, %p125
      %p127 = scmp.le.s32.totalorder 1, %s9
      %p128 = scmp.lt.s32.totalorder %s9, 5
      %p129 = pnand %p127, %p128
      %p130 = pneg %p129
      // Predicated region
      $region9: #{up_forward.1} parent=5 // pred_check
        _
      $region10: #{up_forward.1} parent=5 // pred_check_branch
        %132 = sbr.rel (%p129) target = $region12
      $region11: #{up_forward.1} parent=5 // pred_region
        %s133 = ssub.s32 %s9, 1
        // Predicated region
        $region13: #{up_forward.1} parent=11 // pred_check
          %p134 = pneg %p70
        $region14: #{up_forward.1} parent=11 // pred_check_branch
          %136 = sbr.rel (%p134) target = $region16
        $region15: #{up_forward.1} parent=11 // pred_region
          _
        $region16: #{up_forward.1} parent=11 // pred_fallthru
          _
        // Predicated region
        $region17: #{up_forward.1} parent=11 // pred_check
          %p137 = pneg %p91
        $region18: #{up_forward.1} parent=11 // pred_check_branch
          %139 = sbr.rel (%p137) target = $region20
        $region19: #{up_forward.1} parent=11 // pred_region
          _
        $region20: #{up_forward.1} parent=11 // pred_fallthru
          _
      $region12: #{up_forward.1} parent=5 // pred_fallthru
        _
      %p140 = scmp.lt.s32.totalorder %s9, 4
      // Predicated region
      $region21: #{up_forward.1} parent=5 // pred_check
        %p141 = pneg %p140
      $region22: #{up_forward.1} parent=5 // pred_check_branch
        %143 = sbr.rel (%p141) target = $region24
      $region23: #{up_forward.1} parent=5 // pred_region
        // Predicated region
        $region25: #{up_forward.1} parent=23 // pred_check
          %p144 = pneg %p43
        $region26: #{up_forward.1} parent=23 // pred_check_branch
          %146 = sbr.rel (%p144) target = $region28
        $region27: #{up_forward.1} parent=23 // pred_region
          %s147 = smul.u32 4, %s17
          %p148 = scmp.lt.s32.totalorder %s16, 1
          %s149 = scalar_select %p148, %s16, 1
          %p150 = scmp.lt.s32.totalorder %s147, 7
          %s151 = scalar_select %p150, %s147, 7
          %s152 = smul.addr %s149, 8
          %s153 = sadd.s32 %s151, %s152
          %s154 = smul.addr %s153, 4
          %s155 = scalar_lea.vmem %s0, %s154
          %s156 = smul.u32 4, %s17
        $region28: #{up_forward.1} parent=23 // pred_fallthru
          _
      $region24: #{up_forward.1} parent=5 // pred_fallthru
        _
      %p157 = scmp.le.s32.totalorder 1, %s9
      %p158 = scmp.lt.s32.totalorder %s9, 5
      %p159 = pnand %p157, %p158
      %p160 = pneg %p159
      // Predicated region
      $region29: #{up_forward.1} parent=5 // pred_check
        _
      $region30: #{up_forward.1} parent=5 // pred_check_branch
        %162 = sbr.rel (%p159) target = $region32
      $region31: #{up_forward.1} parent=5 // pred_region
        %s163 = ssub.s32 %s9, 1
        %s164 = smul.u32 4, %s19
        %p165 = scmp.lt.s32.totalorder %s18, 1
        %s166 = scalar_select %p165, %s18, 1
        %p167 = scmp.lt.s32.totalorder %s164, 7
        %s168 = scalar_select %p167, %s164, 7
        %s169 = smul.addr %s166, 8
        %s170 = sadd.s32 %s168, %s169
        %s171 = smul.addr %s170, 4
        %s172 = scalar_lea.vmem %s0, %s171
        %p173 = pneg %p49
        %p174 = pneg %p46
        %p175 = pneg %p70
        %p176 = pneg %p67
        %p177 = pneg %p91
        %p178 = pneg %p88
        %p179 = pneg %p119
        %p180 = pneg %p116
        %s181 = sand.u32 %s106, 1
        %s182 = sand.u32 %s106, 1
        %s183 = smul.addr %s182, 64
        %s184 = scalar_lea.vmem [#allocation2], %s183
        %s185 = smul.u32 4, %s19
        %p186 = scmp.lt.s32.totalorder %s18, 1
        %s187 = scalar_select %p186, %s18, 1
        %p188 = scmp.lt.s32.totalorder %s185, 7
        %s189 = scalar_select %p188, %s185, 7
        %s190 = smul.addr %s187, 8
        %s191 = sadd.s32 %s189, %s190
        %s192 = smul.addr %s191, 4
        %s193 = scalar_lea.vmem %s0, %s192
        %s194 = smul.u32 4, %s19
        %s195 = smul.u32 4, %s19
        %v196 = vld [vmem:[%s1] sm:$0xff]
        %v197 = vld [vmem:[%s1 + $0x8] sm:$0xff]
        %v198 = vld [vmem:[%s193] sm:$0xff]
        %v199 = vld [vmem:[%s193 + $0x8] sm:$0xff]
        %v200 = vld [vmem:[%s2] sm:$0xff]
        %v201 = vld [vmem:[%s2 + $0x8] sm:$0xff]
        %203 = vset.pattern.permute.xlu0 0
        %204 = vperm.xlu0 %203, %v200
        %v205 = vpop.permute.xlu0 %204
        %208 = vset.pattern.permute.xlu0 0
        %209 = vperm.xlu0 %208, %v201
        %v210 = vpop.permute.xlu0 %209
        %v214 = vcombine.high %v198, %v198
        %v215 = vcombine.high %v199, %v199
        %vm216 = vcmask 31744
        %v218 = vsel %vm216, %v196, 0
        %v221 = vsel %vm216, %v197, 0
        %vm223 = vcmask 1043456
        %v224 = vsel %vm223, %v198, 0
        %v226 = vsel %vm223, %v214, 0
        %v228 = vsel %vm223, %v199, 0
        %v230 = vsel %vm223, %v215, 0
        %232 = vmatprep.subr.mxu0 0.0
        %233 = vmatpush1.msra.mxu0 0.0
        %234 = vmatprep.subr.mxu0 0.0
        %235 = vmatpush1.msra.mxu0 0.0
        %236 = vmatprep.subr.mxu0 0.0
        %237 = vmatpush1.msra.mxu0 0.0
        %238 = vmatprep.subr.mxu0 0.0
        %239 = vmatpush1.msra.mxu0 0.0
        %240 = vmatprep.subr.mxu0 0.0
        %241 = vmatpush1.msra.mxu0 0.0
        %242 = vmatprep.subr.mxu0 0.0
        %243 = vmatpush1.msra.mxu0 0.0
        %244 = vmatprep.subr.mxu0 0.0
        %245 = vmatpush1.msra.mxu0 0.0
        %246 = vmatprep.subr.mxu0 0.0
        %247 = vmatpush1.msra.mxu0 0.0
        %248 = vmatprep.subr.mxu0 0.0
        %249 = vmatpush1.msra.mxu0 0.0
        %250 = vmatprep.subr.mxu0 0.0
        %251 = vmatpush1.msra.mxu0 0.0
        %252 = vmatprep.subr.mxu0 0.0
        %253 = vmatpush1.msra.mxu0 0.0
        %254 = vmatprep.subr.mxu0 0.0
        %255 = vmatpush1.msra.mxu0 0.0
        %256 = vmatprep.subr.mxu0 0.0
        %257 = vmatpush1.msra.mxu0 0.0
        %258 = vmatprep.subr.mxu0 0.0
        %259 = vmatpush1.msra.mxu0 0.0
        %260 = vmatprep.subr.mxu0 0.0
        %261 = vmatpush1.msra.mxu0 0.0
        %262 = vmatprep.subr.mxu0 %v226
        %263 = vmatpush1.msra.mxu0 %v224
        %264 = vmatprep.subr.mxu0 0.0
        %265 = vmatpush2.msra.mxu0 0.0
        %266 = vmatprep.subr.mxu0 0.0
        %267 = vmatpush2.msra.mxu0 0.0
        %268 = vmatprep.subr.mxu0 0.0
        %269 = vmatpush2.msra.mxu0 0.0
        %270 = vmatprep.subr.mxu0 0.0
        %271 = vmatpush2.msra.mxu0 0.0
        %272 = vmatprep.subr.mxu0 0.0
        %273 = vmatpush2.msra.mxu0 0.0
        %274 = vmatprep.subr.mxu0 0.0
        %275 = vmatpush2.msra.mxu0 0.0
        %276 = vmatprep.subr.mxu0 0.0
        %277 = vmatpush2.msra.mxu0 0.0
        %278 = vmatprep.subr.mxu0 0.0
        %279 = vmatpush2.msra.mxu0 0.0
        %280 = vmatprep.subr.mxu0 0.0
        %281 = vmatpush2.msra.mxu0 0.0
        %282 = vmatprep.subr.mxu0 0.0
        %283 = vmatpush2.msra.mxu0 0.0
        %284 = vmatprep.subr.mxu0 0.0
        %285 = vmatpush2.msra.mxu0 0.0
        %286 = vmatprep.subr.mxu0 0.0
        %287 = vmatpush2.msra.mxu0 0.0
        %288 = vmatprep.subr.mxu0 0.0
        %289 = vmatpush2.msra.mxu0 0.0
        %290 = vmatprep.subr.mxu0 0.0
        %291 = vmatpush2.msra.mxu0 0.0
        %292 = vmatprep.subr.mxu0 0.0
        %293 = vmatpush2.msra.mxu0 0.0
        %294 = vmatprep.subr.mxu0 0.0
        %295 = vmatpush2.msra.mxu0 0.0
        %296 = vmatprep.mubr.f32.mxu0 0.0
        %297 = vmatmul.mubr.f32.gmra.mxu0 %v218
        %v298 = vpop.f32.mrf.mxu0
        %v299 = vadd.f32 %v205, %v298
        %v300 = vpop.f32.mrf.mxu0
        %v301 = vadd.f32 %v205, %v300
        %302 = vmatprep.mubr.f32.mxu0 0.0
        %303 = vmatmul.mubr.f32.gmra.mxu0 %v221
        %v304 = vpop.f32.mrf.mxu0
        %v305 = vadd.f32 %v210, %v304
        %v306 = vpop.f32.mrf.mxu0
        %v307 = vadd.f32 %v210, %v306
        %308 = vdwg.mxu0
        %309 = vmatprep.subr.mxu0 0.0
        %310 = vmatpush1.msra.mxu0 0.0
        %311 = vmatprep.subr.mxu0 0.0
        %312 = vmatpush1.msra.mxu0 0.0
        %313 = vmatprep.subr.mxu0 0.0
        %314 = vmatpush1.msra.mxu0 0.0
        %315 = vmatprep.subr.mxu0 0.0
        %316 = vmatpush1.msra.mxu0 0.0
        %317 = vmatprep.subr.mxu0 0.0
        %318 = vmatpush1.msra.mxu0 0.0
        %319 = vmatprep.subr.mxu0 0.0
        %320 = vmatpush1.msra.mxu0 0.0
        %321 = vmatprep.subr.mxu0 0.0
        %322 = vmatpush1.msra.mxu0 0.0
        %323 = vmatprep.subr.mxu0 0.0
        %324 = vmatpush1.msra.mxu0 0.0
        %325 = vmatprep.subr.mxu0 0.0
        %326 = vmatpush1.msra.mxu0 0.0
        %327 = vmatprep.subr.mxu0 0.0
        %328 = vmatpush1.msra.mxu0 0.0
        %329 = vmatprep.subr.mxu0 0.0
        %330 = vmatpush1.msra.mxu0 0.0
        %331 = vmatprep.subr.mxu0 0.0
        %332 = vmatpush1.msra.mxu0 0.0
        %333 = vmatprep.subr.mxu0 0.0
        %334 = vmatpush1.msra.mxu0 0.0
        %335 = vmatprep.subr.mxu0 0.0
        %336 = vmatpush1.msra.mxu0 0.0
        %337 = vmatprep.subr.mxu0 0.0
        %338 = vmatpush1.msra.mxu0 0.0
        %339 = vmatprep.subr.mxu0 %v230
        %340 = vmatpush1.msra.mxu0 %v228
        %341 = vmatprep.subr.mxu0 0.0
        %342 = vmatpush2.msra.mxu0 0.0
        %343 = vmatprep.subr.mxu0 0.0
        %344 = vmatpush2.msra.mxu0 0.0
        %345 = vmatprep.subr.mxu0 0.0
        %346 = vmatpush2.msra.mxu0 0.0
        %347 = vmatprep.subr.mxu0 0.0
        %348 = vmatpush2.msra.mxu0 0.0
        %349 = vmatprep.subr.mxu0 0.0
        %350 = vmatpush2.msra.mxu0 0.0
        %351 = vmatprep.subr.mxu0 0.0
        %352 = vmatpush2.msra.mxu0 0.0
        %353 = vmatprep.subr.mxu0 0.0
        %354 = vmatpush2.msra.mxu0 0.0
        %355 = vmatprep.subr.mxu0 0.0
        %356 = vmatpush2.msra.mxu0 0.0
        %357 = vmatprep.subr.mxu0 0.0
        %358 = vmatpush2.msra.mxu0 0.0
        %359 = vmatprep.subr.mxu0 0.0
        %360 = vmatpush2.msra.mxu0 0.0
        %361 = vmatprep.subr.mxu0 0.0
        %362 = vmatpush2.msra.mxu0 0.0
        %363 = vmatprep.subr.mxu0 0.0
        %364 = vmatpush2.msra.mxu0 0.0
        %365 = vmatprep.subr.mxu0 0.0
        %366 = vmatpush2.msra.mxu0 0.0
        %367 = vmatprep.subr.mxu0 0.0
        %368 = vmatpush2.msra.mxu0 0.0
        %369 = vmatprep.subr.mxu0 0.0
        %370 = vmatpush2.msra.mxu0 0.0
        %371 = vmatprep.subr.mxu0 0.0
        %372 = vmatpush2.msra.mxu0 0.0
        %373 = vmatprep.mubr.f32.mxu0 0.0
        %374 = vmatmul.mubr.f32.gmra.mxu0 %v218
        %v375 = vpop.f32.mrf.mxu0
        %v376 = vadd.f32 %v205, %v375
        %v377 = vpop.f32.mrf.mxu0
        %v378 = vadd.f32 %v205, %v377
        %379 = vmatprep.mubr.f32.mxu0 0.0
        %380 = vmatmul.mubr.f32.gmra.mxu0 %v221
        %v381 = vpop.f32.mrf.mxu0
        %v382 = vadd.f32 %v210, %v381
        %v383 = vpop.f32.mrf.mxu0
        %v384 = vadd.f32 %v210, %v383
        %385 = vdwg.mxu0
        %v386 = vmax.f32 %v299, 0.0
        %v387 = vmax.f32 %v301, 0.0
        %v388 = vmax.f32 %v376, 0.0
        %v389 = vmax.f32 %v378, 0.0
        %v390 = vmax.f32 %v305, 0.0
        %v391 = vmax.f32 %v307, 0.0
        %v392 = vmax.f32 %v382, 0.0
        %v393 = vmax.f32 %v384, 0.0
        %394 = vst [vmem:[%s184] sm:$0xff] %v386
        %395 = vst [vmem:[%s184 + $0x8] sm:$0xff] %v387
        %396 = vst [vmem:[%s184 + $0x10] sm:$0xff] %v388
        %397 = vst [vmem:[%s184 + $0x18] sm:$0xff] %v389
        %398 = vst [vmem:[%s184 + $0x20] sm:$0xff] %v390
        %399 = vst [vmem:[%s184 + $0x28] sm:$0xff] %v391
        %400 = vst [vmem:[%s184 + $0x30] sm:$0xff] %v392
        %401 = vst [vmem:[%s184 + $0x38] sm:$0xff] %v393
        %s402 = sand.u32 %s106, 1
        %s403 = sand.u32 %s106, 1
        %s404 = smul.addr %s403, 64
        %s405 = scalar_lea.vmem [#allocation2], %s404
        // Predicated region
        $region33: #{up_forward.1} parent=31 // pred_check
          %p406 = pneg %p116
        $region34: #{up_forward.1} parent=31 // pred_check_branch
          %408 = sbr.rel (%p406) target = $region36
        $region35: #{up_forward.1} parent=31 // pred_region
          %s409 = smul.u32 4, %s19
          %s410 = smul.addr %s18, 16
          %s411 = sadd.s32 %s409, %s410
          %s412 = smul.addr %s411, 8
          %s413 = scalar_lea.vmem %s3, %s412
          // Predicated region
          $region37: #{up_forward.1} parent=35 // pred_check
            _
          $region38: #{up_forward.1} parent=35 // pred_check_branch
            %415 = sbr.rel (0) target = $region40
          $region39: #{up_forward.1} parent=35 // pred_region
            // Predicated region
            $region41: #{up_forward.1} parent=39 // pred_check
              _
            $region42: #{up_forward.1} parent=39 // pred_check_branch
              %417 = sbr.rel (0) target = $region44
            $region43: #{up_forward.1} parent=39 // pred_region
              loop: start=0, step=1, limit=1
              $region45: #{up_forward.1} parent=43 // loop_pre_header
                _
              $region46: #{up_forward.1} parent=43 // loop_header
                %s419 = sphi 0, %s423
                %p420 = scmp.ge.s32.totalorder %s419, 1
                %s424 = sphi %s405, %s405
                %s425 = sphi %s413, %s413
              $region47: #{up_forward.1} parent=43 // loop_header_branch
                %422 = sbr.rel (%p420) target = $region51
              $region48: #{up_forward.1} parent=43 // loop_body
                %v426 = vld [vmem:[%s424] sm:$0xff]
                %427 = vst [vmem:[%s425] sm:$0xff] %v426
                %v428 = vld [vmem:[%s424 + $0x8] sm:$0xff]
                %429 = vst [vmem:[%s425 + $0x8] sm:$0xff] %v428
                %v430 = vld [vmem:[%s424 + $0x10] sm:$0xff]
                %431 = vst [vmem:[%s425 + $0x10] sm:$0xff] %v430
                %v432 = vld [vmem:[%s424 + $0x18] sm:$0xff]
                %433 = vst [vmem:[%s425 + $0x18] sm:$0xff] %v432
                %v434 = vld [vmem:[%s424 + $0x20] sm:$0xff]
                %435 = vst [vmem:[%s425 + $0x40] sm:$0xff] %v434
                %v436 = vld [vmem:[%s424 + $0x28] sm:$0xff]
                %437 = vst [vmem:[%s425 + $0x48] sm:$0xff] %v436
                %v438 = vld [vmem:[%s424 + $0x30] sm:$0xff]
                %439 = vst [vmem:[%s425 + $0x50] sm:$0xff] %v438
                %v440 = vld [vmem:[%s424 + $0x38] sm:$0xff]
                %441 = vst [vmem:[%s425 + $0x58] sm:$0xff] %v440
              $region49: #{up_forward.1} parent=43 // loop_footer
                %s423 = sadd.s32 1, %s419
              $region50: #{up_forward.1} parent=43 // loop_footer_branch
                %418 = sbr.rel target = $region46
              $region51: #{up_forward.1} parent=43 // loop_exit
                _
            $region44: #{up_forward.1} parent=39 // pred_fallthru
              _
            // Predicated region
            $region52: #{up_forward.1} parent=39 // pred_check
              _
            $region53: #{up_forward.1} parent=39 // pred_check_branch
              %443 = sbr.rel target = $region55
            $region54: #{up_forward.1} parent=39 // pred_region
              _
            $region55: #{up_forward.1} parent=39 // pred_fallthru
              _
          $region40: #{up_forward.1} parent=35 // pred_fallthru
            _
          %444 = vnop
        $region36: #{up_forward.1} parent=31 // pred_fallthru
          _
      $region32: #{up_forward.1} parent=5 // pred_fallthru
        _
      %p445 = scmp.le.s32.totalorder 2, %s9
      // Predicated region
      $region56: #{up_forward.1} parent=5 // pred_check
        %p446 = pneg %p445
      $region57: #{up_forward.1} parent=5 // pred_check_branch
        %448 = sbr.rel (%p446) target = $region59
      $region58: #{up_forward.1} parent=5 // pred_region
        %s449 = ssub.s32 %s9, 2
        // Predicated region
        $region60: #{up_forward.1} parent=58 // pred_check
          %p450 = pneg %p122
        $region61: #{up_forward.1} parent=58 // pred_check_branch
          %452 = sbr.rel (%p450) target = $region63
        $region62: #{up_forward.1} parent=58 // pred_region
          %s453 = sand.u32 %s107, 1
          %s454 = sand.u32 %s107, 1
          %s455 = smul.addr %s454, 64
          %s456 = scalar_lea.vmem [#allocation2], %s455
        $region63: #{up_forward.1} parent=58 // pred_fallthru
          _
      $region59: #{up_forward.1} parent=5 // pred_fallthru
        _
    $region6: #{up_forward.1} parent=1 // loop_footer
      %s13 = sadd.s32 1, %s9
    $region7: #{up_forward.1} parent=1 // loop_footer_branch
      %8 = sbr.rel target = $region3
    $region8: #{up_forward.1} parent=1 // loop_exit
      _

</llo_original>
